<compile_context>
chip_gen: v6e
topology: v6e:2x2x1
jax: 0.10.0
libtpu: 0.0.40
codegen_flags: <defaults>
</compile_context>

<pallas_src>
import math
import jax
import jax.numpy as jnp
from jax.experimental import pallas as pl
from jax.experimental.pallas import tpu as pltpu


def _round_up(a: int, m: int) -> int:
    return ((a + m - 1) // m) * m


def _projector_kernel(x_ref, w1_ref, b1_ref, w2_ref, b2_ref, o_ref):
    # x_ref:  (tm, in_features)
    # w1_ref: (in_features, hidden_p)     b1_ref: (1, hidden_p)
    # w2_ref: (hidden_p, out_p)           b2_ref: (1, out_p)
    # o_ref:  (tm, out_p)
    x = x_ref[...]
    h = jnp.dot(x, w1_ref[...], preferred_element_type=jnp.float32) + b1_ref[...]
    h = h * jax.nn.sigmoid(h)                       # SiLU in fp32 (EUP sigmoid)
    h = h.astype(w2_ref.dtype)                      # autocast-style cast for MXU
    out = jnp.dot(h, w2_ref[...], preferred_element_type=jnp.float32) + b2_ref[...]
    o_ref[...] = out.astype(o_ref.dtype)


def prepare_projector_params(w1, b1, w2, b2, *, lane=128):
    """Transpose + zero-pad PyTorch-layout Linear params ONCE (not per call).

    w1: [hidden, in]  b1: [hidden]   w2: [out, hidden]  b2: [out]
    Returns (w1t, b1r, w2t, b2r, out_features) with hidden/out padded to `lane`.
    """
    w1 = jnp.asarray(w1); b1 = jnp.asarray(b1)
    w2 = jnp.asarray(w2); b2 = jnp.asarray(b2)
    hidden, in_features = w1.shape
    out_features = w2.shape[0]
    hidden_p = _round_up(hidden, lane)
    out_p = _round_up(out_features, lane)

    w1t = jnp.zeros((in_features, hidden_p), w1.dtype).at[:, :hidden].set(w1.T)
    b1r = jnp.zeros((1, hidden_p), jnp.float32).at[:, :hidden].set(
        b1.astype(jnp.float32).reshape(1, hidden))
    w2t = jnp.zeros((hidden_p, out_p), w2.dtype).at[:hidden, :out_features].set(w2.T)
    b2r = jnp.zeros((1, out_p), jnp.float32).at[:, :out_features].set(
        b2.astype(jnp.float32).reshape(1, out_features))
    return w1t, b1r, w2t, b2r, out_features


def _choose_tm(M, in_features, hidden_p, out_p, itemsize,
               vmem_budget=32 * 1024 * 1024, tm_max=512):
    # Resident weight/bias tiles (not re-fetched, but budget them once with a
    # safety factor of 2 for compiler scratch / buffering).
    weight_bytes = 2 * itemsize * (in_features * hidden_p + hidden_p * out_p) \
        + 2 * 4 * (hidden_p + out_p)
    avail = max(vmem_budget - weight_bytes, 1 << 20)
    # Per-row VMEM: double-buffered x + out tiles, plus fp32 intermediates.
    per_row = 2 * itemsize * (in_features + out_p) + 4 * (hidden_p + out_p)
    tm = min(tm_max, max(8, (avail // per_row) // 8 * 8))
    # Keep at least 2 grid steps so a v7x chip can shard across both TCs.
    tm = min(tm, max(8, _round_up(pl.cdiv(M, 2), 8)))
    # Sublane-pack-friendly for 16-bit activations.
    align = 16 if itemsize == 2 else 8
    return max(align, (int(tm) // align) * align)


def projector_forward(x, w1t, b1r, w2t, b2r, out_features, *, tm=None):
    """x: [..., in_features]; params from prepare_projector_params()."""
    in_features = x.shape[-1]
    hidden_p = w1t.shape[1]
    out_p = w2t.shape[1]
    lead_shape = x.shape[:-1]
    M = int(math.prod(lead_shape)) if lead_shape else 1
    itemsize = jnp.dtype(x.dtype).itemsize

    if tm is None:
        tm = _choose_tm(M, in_features, hidden_p, out_p, itemsize)
    tm = max(8, (int(tm) // 8) * 8)

    n_steps = pl.cdiv(M, tm)
    M_pad = n_steps * tm

    x2d = x.reshape(M, in_features)
    if M_pad != M:
        x2d = jnp.pad(x2d, ((0, M_pad - M), (0, 0)))

    flops = 2 * M_pad * (in_features * hidden_p + hidden_p * out_p)
    bytes_accessed = (M_pad * (in_features + out_p) * itemsize
                      + (w1t.size + w2t.size) * jnp.dtype(w1t.dtype).itemsize
                      + (b1r.size + b2r.size) * 4)
    cost = pl.CostEstimate(flops=int(flops),
                           transcendentals=int(M_pad * hidden_p),
                           bytes_accessed=int(bytes_accessed))

    out2d = pl.pallas_call(
        _projector_kernel,
        out_shape=jax.ShapeDtypeStruct((M_pad, out_p), x.dtype),
        grid_spec=pltpu.PrefetchScalarGridSpec(
            num_scalar_prefetch=0,
            grid=(n_steps,),
            in_specs=[
                pl.BlockSpec((tm, in_features), lambda i: (i, 0)),
                pl.BlockSpec((in_features, hidden_p), lambda i: (0, 0)),
                pl.BlockSpec((1, hidden_p), lambda i: (0, 0)),
                pl.BlockSpec((hidden_p, out_p), lambda i: (0, 0)),
                pl.BlockSpec((1, out_p), lambda i: (0, 0)),
            ],
            out_specs=pl.BlockSpec((tm, out_p), lambda i: (i, 0)),
        ),
        compiler_params=pltpu.CompilerParams(
            dimension_semantics=("parallel",)),
        cost_estimate=cost,
    )(x2d, w1t, b1r, w2t, b2r)

    out2d = out2d[:M, :out_features]
    return out2d.reshape(*lead_shape, out_features)


def xavier_uniform(key, shape, dtype=jnp.float32):
    # shape = (fan_out, fan_in) — PyTorch nn.Linear weight layout
    fan_out, fan_in = shape
    bound = math.sqrt(6.0 / (fan_in + fan_out))
    return jax.random.uniform(key, shape, dtype, minval=-bound, maxval=bound)


if __name__ == "__main__":
    # Small shapes consistent with the module (in=32, hidden=16, out=64)
    batch, seq = 2, 8
    in_features, hidden_dim, out_features = 32, 16, 64

    key = jax.random.PRNGKey(0)
    kx, kw1, kw2 = jax.random.split(key, 3)

    x = jax.random.normal(kx, (batch, seq, in_features), dtype=jnp.float32)

    # Deterministic parameter init mirroring Projector.__init__
    w1 = xavier_uniform(kw1, (hidden_dim, in_features))   # fc1.weight
    b1 = jnp.zeros((hidden_dim,), jnp.float32)            # fc1.bias
    w2 = xavier_uniform(kw2, (out_features, hidden_dim))  # fc2.weight
    b2 = jnp.zeros((out_features,), jnp.float32)          # fc2.bias

    # Prepare (transpose + lane-pad) the params ONCE.
    w1t, b1r, w2t, b2r, out_f = prepare_projector_params(w1, b1, w2, b2)

    out = projector_forward(x, w1t, b1r, w2t, b2r, out_f)
    out = jax.block_until_ready(out)

    # Reference check in plain JAX
    h_ref = x @ w1.T + b1
    ref = (h_ref * jax.nn.sigmoid(h_ref)) @ w2.T + b2
    assert out.shape == (batch, seq, out_features)
    assert jnp.allclose(out, ref, atol=1e-5, rtol=1e-5)

    print("KERNEL_OK")
</pallas_src>

<mosaic_0001>
module attributes {stable_mosaic.version = 11 : i64} {
  func.func @_projector_kernel(%arg0: i32, %arg1: memref<8x32xf32, #tpu.memory_space<vmem>>, %arg2: memref<32x128xf32, #tpu.memory_space<vmem>>, %arg3: memref<1x128xf32, #tpu.memory_space<vmem>>, %arg4: memref<128x128xf32, #tpu.memory_space<vmem>>, %arg5: memref<1x128xf32, #tpu.memory_space<vmem>>, %arg6: memref<8x128xf32, #tpu.memory_space<vmem>>) attributes {dimension_semantics = [#tpu.dimension_semantics<parallel>], iteration_bounds = array<i64: 2>, scalar_prefetch = 0 : i64, scratch_operands = 0 : i64, tpu.core_type = #tpu.core_type<tc>, window_params = [{transform_indices = @transform_0, window_bounds = array<i64: 8, 32>}, {pipeline_mode = #tpu.pipeline_mode<synchronous>, transform_indices = @transform_1, window_bounds = array<i64: 32, 128>}, {pipeline_mode = #tpu.pipeline_mode<synchronous>, transform_indices = @transform_2, window_bounds = array<i64: 1, 128>}, {pipeline_mode = #tpu.pipeline_mode<synchronous>, transform_indices = @transform_3, window_bounds = array<i64: 128, 128>}, {pipeline_mode = #tpu.pipeline_mode<synchronous>, transform_indices = @transform_4, window_bounds = array<i64: 1, 128>}, {transform_indices = @transform_5, window_bounds = array<i64: 8, 128>}]} {
    %c0 = arith.constant 0 : index
    %c0_0 = arith.constant 0 : index
    %0 = vector.load %arg1[%c0, %c0_0] : memref<8x32xf32, #tpu.memory_space<vmem>>, vector<8x32xf32>
    %c0_1 = arith.constant 0 : index
    %c0_2 = arith.constant 0 : index
    %1 = vector.load %arg2[%c0_1, %c0_2] : memref<32x128xf32, #tpu.memory_space<vmem>>, vector<32x128xf32>
    %cst = arith.constant dense<0.000000e+00> : vector<8x128xf32>
    %2 = tpu.matmul %0, %1, %cst {dimension_numbers = #tpu.dot_dimension_numbers<[1], [0], [0], [1], [0, 0, 1, 1], [], []>} : vector<8x32xf32>, vector<32x128xf32>, vector<8x128xf32> -> vector<8x128xf32>
    %c0_3 = arith.constant 0 : index
    %c0_4 = arith.constant 0 : index
    %3 = vector.load %arg3[%c0_3, %c0_4] : memref<1x128xf32, #tpu.memory_space<vmem>>, vector<1x128xf32>
    %4 = vector.broadcast %3 : vector<1x128xf32> to vector<8x128xf32>
    %5 = arith.addf %2, %4 : vector<8x128xf32>
    %6 = arith.negf %5 : vector<8x128xf32>
    %7 = math.exp %6 : vector<8x128xf32>
    %cst_5 = arith.constant 1.000000e+00 : f32
    %8 = vector.broadcast %cst_5 : f32 to vector<8x128xf32>
    %9 = arith.addf %8, %7 : vector<8x128xf32>
    %10 = arith.divf %8, %9 : vector<8x128xf32>
    %11 = arith.mulf %5, %10 : vector<8x128xf32>
    %c0_6 = arith.constant 0 : index
    %c0_7 = arith.constant 0 : index
    %12 = vector.load %arg4[%c0_6, %c0_7] : memref<128x128xf32, #tpu.memory_space<vmem>>, vector<128x128xf32>
    %cst_8 = arith.constant dense<0.000000e+00> : vector<8x128xf32>
    %13 = tpu.matmul %11, %12, %cst_8 {dimension_numbers = #tpu.dot_dimension_numbers<[1], [0], [0], [1], [0, 0, 1, 1], [], []>} : vector<8x128xf32>, vector<128x128xf32>, vector<8x128xf32> -> vector<8x128xf32>
    %c0_9 = arith.constant 0 : index
    %c0_10 = arith.constant 0 : index
    %14 = vector.load %arg5[%c0_9, %c0_10] : memref<1x128xf32, #tpu.memory_space<vmem>>, vector<1x128xf32>
    %15 = vector.broadcast %14 : vector<1x128xf32> to vector<8x128xf32>
    %16 = arith.addf %13, %15 : vector<8x128xf32>
    %c0_11 = arith.constant 0 : index
    %c0_12 = arith.constant 0 : index
    %17 = vector.load %arg6[%c0_11, %c0_12] : memref<8x128xf32, #tpu.memory_space<vmem>>, vector<8x128xf32>
    tpu.vector_store %arg6[%c0_11, %c0_12], %16 {strides = array<i32>} : memref<8x128xf32, #tpu.memory_space<vmem>>, vector<8x128xf32>,
    return
  }
  func.func @transform_0(%arg0: i32) -> (i32, i32) {
    %c0_i32 = arith.constant 0 : i32
    %c0_i32_0 = arith.constant 0 : i32
    return %arg0, %c0_i32 : i32, i32
  }
  func.func @transform_1(%arg0: i32) -> (i32, i32) {
    %c0_i32 = arith.constant 0 : i32
    %c0_i32_0 = arith.constant 0 : i32
    %c0_i32_1 = arith.constant 0 : i32
    return %c0_i32, %c0_i32_0 : i32, i32
  }
  func.func @transform_2(%arg0: i32) -> (i32, i32) {
    %c0_i32 = arith.constant 0 : i32
    %c0_i32_0 = arith.constant 0 : i32
    %c0_i32_1 = arith.constant 0 : i32
    return %c0_i32, %c0_i32_0 : i32, i32
  }
  func.func @transform_3(%arg0: i32) -> (i32, i32) {
    %c0_i32 = arith.constant 0 : i32
    %c0_i32_0 = arith.constant 0 : i32
    %c0_i32_1 = arith.constant 0 : i32
    return %c0_i32, %c0_i32_0 : i32, i32
  }
  func.func @transform_4(%arg0: i32) -> (i32, i32) {
    %c0_i32 = arith.constant 0 : i32
    %c0_i32_0 = arith.constant 0 : i32
    %c0_i32_1 = arith.constant 0 : i32
    return %c0_i32, %c0_i32_0 : i32, i32
  }
  func.func @transform_5(%arg0: i32) -> (i32, i32) {
    %c0_i32 = arith.constant 0 : i32
    %c0_i32_0 = arith.constant 0 : i32
    return %arg0, %c0_i32 : i32, i32
  }
}

</mosaic_0001>

<llo_original>
// kernel: tpu_custom_call.1
$region0: #{tpu_custom_call.1}
  #allocation0 [shape = 'u32[]', space=smem, size = 0x4, offset = 0x4, fixed_abs, tag = 'smem constant byte address 0x4 - core index']
  #allocation1 [shape = 'u32[144,128]{1,0:T(1,128)}', space=vmem, size = 0x12000, scoped, tag = 'internal scratch']
  %s0 = inlined_call_operand.hbm [shape: f32[16,32], index: 0, kind: input, shape index: {}]
  %s1 = inlined_call_operand.hbm [shape: f32[32,128], index: 1, kind: input, shape index: {}]
  %s2 = inlined_call_operand.vmem [shape: f32[1,128], index: 2, kind: input, shape index: {}]
  %s3 = inlined_call_operand.hbm [shape: f32[128,128], index: 3, kind: input, shape index: {}]
  %s4 = inlined_call_operand.vmem [shape: f32[1,128], index: 4, kind: input, shape index: {}]
  %s5 = inlined_call_operand.hbm [shape: f32[16,128], index: 5, kind: output, shape index: {}]
  %s6 = sld [smem:[#allocation0]]
  $region65: #{tpu_custom_call.1} parent=0
    _
  %s8 = ssub.s32 1, %s6
  %s9 = scalar_select 0, %s8, %s6
  $region1: #{tpu_custom_call.1} parent=0
    #allocation2 [shape = 'u8[8192]{0}', space=vmem, size = 0x2000, scoped, tag = 'input window, operand 0']
    #allocation3 [shape = 's32[2]{0}', space=sflag, size = 0x8, scoped, tag = 'scoped memory for tpu_custom_call.1']
    #allocation4 [shape = 's32[2]{0}', space=sflag, size = 0x8, scoped, tag = 'scoped memory for tpu_custom_call.1']
    #allocation5 [shape = 'u8[16384]{0}', space=vmem, size = 0x4000, scoped, tag = 'input window, operand 1, single buffered']
    #allocation6 [shape = 's32[1]{0}', space=sflag, size = 0x4, scoped, tag = 'scoped memory for tpu_custom_call.1']
    #allocation7 [shape = 'u8[65536]{0}', space=vmem, size = 0x10000, scoped, tag = 'input window, operand 3, single buffered']
    #allocation8 [shape = 'u8[8192]{0}', space=vmem, size = 0x2000, scoped, tag = 'output window, operand 0']
    %10 = vsyncpa [#allocation3], 0
    %s11 = scalar_lea.sflag [#allocation3], 1
    %12 = vsyncpa %s11, 0
    %13 = vsyncpa [#allocation6], 0
    %14 = vsyncpa [#allocation4], 0
    %s15 = scalar_lea.sflag [#allocation4], 1
    %16 = vsyncpa %s15, 0
    loop: start=0, step=1, limit=4
    $region2: #{tpu_custom_call.1} parent=1 // loop_pre_header
      _
    $region3: #{tpu_custom_call.1} parent=1 // loop_header
      %s18 = sphi 0, %s22
      %p19 = scmp.ge.s32.totalorder %s18, 4
      %s28 = sphi 0, %s30
      %s31 = sphi 0, %s28
      %s32 = sphi 0, %s31
      %s48 = sphi 0, %s32
      %s52 = sphi 0, %s52
      %s54 = sphi 0, %s52
      %s55 = sphi 0, %s54
      %s69 = sphi 0, %s55
      %s73 = sphi 0, %s73
      %s75 = sphi 0, %s73
      %s76 = sphi 0, %s75
      %s90 = sphi 0, %s76
      %s94 = sphi 0, %s94
      %s96 = sphi 0, %s94
      %s97 = sphi 0, %s96
      %s111 = sphi 0, %s97
      %s115 = sphi 0, %s115
      %s117 = sphi 0, %s115
      %s118 = sphi 0, %s117
      %s132 = sphi 0, %s118
      %s138 = sphi 0, %s140
      %s141 = sphi 0, %s138
      %s142 = sphi 0, %s141
      %s158 = sphi 0, %s142
    $region4: #{tpu_custom_call.1} parent=1 // loop_header_branch
      %21 = sbr.rel (%p19) target = $region8
    $region5: #{tpu_custom_call.1} parent=1 // loop_body
      %s23 = ssub.s32 %s18, 1
      %s24 = ssub.s32 %s18, 2
      %s25 = sadd.s32 %s18, 1
      %s26 = ssub.s32 %s18, %s25
      %p27 = scmp.eq.s32.totalorder %s26, 0
      %s29 = sadd.s32 %s28, 1
      %s30 = scalar_select %p27, %s28, %s29
      %p33 = pneg %p27
      %p34 = scmp.eq.s32.totalorder %s18, 1
      %p35 = por %p33, %p34
      %p36 = scmp.ne.s32.totalorder %s28, %s31
      %p37 = scmp.eq.s32.totalorder %s18, 0
      %p38 = por %p36, %p37
      %p39 = scmp.ne.s32.totalorder %s28, %s31
      %p40 = scmp.eq.s32.totalorder %s23, 1
      %p41 = por %p39, %p40
      %p42 = scmp.ne.s32.totalorder %s31, %s32
      %p43 = scmp.eq.s32.totalorder %s23, 0
      %p44 = por %p42, %p43
      %p45 = scmp.ne.s32.totalorder %s31, %s32
      %p46 = scmp.eq.s32.totalorder %s24, 1
      %p47 = por %p45, %p46
      %p49 = scmp.ne.s32.totalorder %s32, %s48
      %p50 = scmp.eq.s32.totalorder %s24, 0
      %p51 = por %p49, %p50
      %s53 = sadd.s32 %s52, 1
      %p56 = scmp.eq.s32.totalorder %s18, 1
      %p57 = scmp.ne.s32.totalorder %s52, %s54
      %p58 = scmp.eq.s32.totalorder %s18, 0
      %p59 = por %p57, %p58
      %p60 = scmp.ne.s32.totalorder %s52, %s54
      %p61 = scmp.eq.s32.totalorder %s23, 1
      %p62 = por %p60, %p61
      %p63 = scmp.ne.s32.totalorder %s54, %s55
      %p64 = scmp.eq.s32.totalorder %s23, 0
      %p65 = por %p63, %p64
      %p66 = scmp.ne.s32.totalorder %s54, %s55
      %p67 = scmp.eq.s32.totalorder %s24, 1
      %p68 = por %p66, %p67
      %p70 = scmp.ne.s32.totalorder %s55, %s69
      %p71 = scmp.eq.s32.totalorder %s24, 0
      %p72 = por %p70, %p71
      %s74 = sadd.s32 %s73, 1
      %p77 = scmp.eq.s32.totalorder %s18, 1
      %p78 = scmp.ne.s32.totalorder %s73, %s75
      %p79 = scmp.eq.s32.totalorder %s18, 0
      %p80 = por %p78, %p79
      %p81 = scmp.ne.s32.totalorder %s73, %s75
      %p82 = scmp.eq.s32.totalorder %s23, 1
      %p83 = por %p81, %p82
      %p84 = scmp.ne.s32.totalorder %s75, %s76
      %p85 = scmp.eq.s32.totalorder %s23, 0
      %p86 = por %p84, %p85
      %p87 = scmp.ne.s32.totalorder %s75, %s76
      %p88 = scmp.eq.s32.totalorder %s24, 1
      %p89 = por %p87, %p88
      %p91 = scmp.ne.s32.totalorder %s76, %s90
      %p92 = scmp.eq.s32.totalorder %s24, 0
      %p93 = por %p91, %p92
      %s95 = sadd.s32 %s94, 1
      %p98 = scmp.eq.s32.totalorder %s18, 1
      %p99 = scmp.ne.s32.totalorder %s94, %s96
      %p100 = scmp.eq.s32.totalorder %s18, 0
      %p101 = por %p99, %p100
      %p102 = scmp.ne.s32.totalorder %s94, %s96
      %p103 = scmp.eq.s32.totalorder %s23, 1
      %p104 = por %p102, %p103
      %p105 = scmp.ne.s32.totalorder %s96, %s97
      %p106 = scmp.eq.s32.totalorder %s23, 0
      %p107 = por %p105, %p106
      %p108 = scmp.ne.s32.totalorder %s96, %s97
      %p109 = scmp.eq.s32.totalorder %s24, 1
      %p110 = por %p108, %p109
      %p112 = scmp.ne.s32.totalorder %s97, %s111
      %p113 = scmp.eq.s32.totalorder %s24, 0
      %p114 = por %p112, %p113
      %s116 = sadd.s32 %s115, 1
      %p119 = scmp.eq.s32.totalorder %s18, 1
      %p120 = scmp.ne.s32.totalorder %s115, %s117
      %p121 = scmp.eq.s32.totalorder %s18, 0
      %p122 = por %p120, %p121
      %p123 = scmp.ne.s32.totalorder %s115, %s117
      %p124 = scmp.eq.s32.totalorder %s23, 1
      %p125 = por %p123, %p124
      %p126 = scmp.ne.s32.totalorder %s117, %s118
      %p127 = scmp.eq.s32.totalorder %s23, 0
      %p128 = por %p126, %p127
      %p129 = scmp.ne.s32.totalorder %s117, %s118
      %p130 = scmp.eq.s32.totalorder %s24, 1
      %p131 = por %p129, %p130
      %p133 = scmp.ne.s32.totalorder %s118, %s132
      %p134 = scmp.eq.s32.totalorder %s24, 0
      %p135 = por %p133, %p134
      %s136 = ssub.s32 %s18, %s25
      %p137 = scmp.eq.s32.totalorder %s136, 0
      %s139 = sadd.s32 %s138, 1
      %s140 = scalar_select %p137, %s138, %s139
      %p143 = pneg %p137
      %p144 = scmp.eq.s32.totalorder %s18, 1
      %p145 = por %p143, %p144
      %p146 = scmp.ne.s32.totalorder %s138, %s141
      %p147 = scmp.eq.s32.totalorder %s18, 0
      %p148 = por %p146, %p147
      %p149 = scmp.ne.s32.totalorder %s138, %s141
      %p150 = scmp.eq.s32.totalorder %s23, 1
      %p151 = por %p149, %p150
      %p152 = scmp.ne.s32.totalorder %s141, %s142
      %p153 = scmp.eq.s32.totalorder %s23, 0
      %p154 = por %p152, %p153
      %p155 = scmp.ne.s32.totalorder %s141, %s142
      %p156 = scmp.eq.s32.totalorder %s24, 1
      %p157 = por %p155, %p156
      %p159 = scmp.ne.s32.totalorder %s142, %s158
      %p160 = scmp.eq.s32.totalorder %s24, 0
      %p161 = por %p159, %p160
      %p162 = scmp.le.s32.totalorder 1, %s18
      %p163 = scmp.lt.s32.totalorder %s18, 3
      %p164 = pnand %p162, %p163
      %p165 = pneg %p164
      // Predicated region
      $region9: #{tpu_custom_call.1} parent=5 // pred_check
        _
      $region10: #{tpu_custom_call.1} parent=5 // pred_check_branch
        %167 = sbr.rel (%p164) target = $region12
      $region11: #{tpu_custom_call.1} parent=5 // pred_region
        %s168 = ssub.s32 %s18, 1
        // Predicated region
        $region13: #{tpu_custom_call.1} parent=11 // pred_check
          %p169 = pneg %p65
        $region14: #{tpu_custom_call.1} parent=11 // pred_check_branch
          %171 = sbr.rel (%p169) target = $region16
        $region15: #{tpu_custom_call.1} parent=11 // pred_region
          %s173 = ssub.s32 512, 512
          %174 = vsyncadd [#allocation6], %s173
          %s175 = sshll.u32 [#allocation5], 4
          %s176 = int_to_ptr.vmem [resolvable:$true] %s175
          %181 = dma.hbm_to_vmem [thread:$0]  %s1, 512, %s176, [#allocation6], 128, 128, 8
        $region16: #{tpu_custom_call.1} parent=11 // pred_fallthru
          _
        // Predicated region
        $region17: #{tpu_custom_call.1} parent=11 // pred_check
          %p182 = pneg %p86
        $region18: #{tpu_custom_call.1} parent=11 // pred_check_branch
          %184 = sbr.rel (%p182) target = $region20
        $region19: #{tpu_custom_call.1} parent=11 // pred_region
          _
        $region20: #{tpu_custom_call.1} parent=11 // pred_fallthru
          _
        // Predicated region
        $region21: #{tpu_custom_call.1} parent=11 // pred_check
          %p185 = pneg %p107
        $region22: #{tpu_custom_call.1} parent=11 // pred_check_branch
          %187 = sbr.rel (%p185) target = $region24
        $region23: #{tpu_custom_call.1} parent=11 // pred_region
          %s189 = ssub.s32 2048, 2048
          %190 = vsyncadd [#allocation6], %s189
          %s191 = sshll.u32 [#allocation7], 4
          %s192 = int_to_ptr.vmem [resolvable:$true] %s191
          %197 = dma.hbm_to_vmem [thread:$0]  %s3, 2048, %s192, [#allocation6], 128, 128, 8
        $region24: #{tpu_custom_call.1} parent=11 // pred_fallthru
          _
        // Predicated region
        $region25: #{tpu_custom_call.1} parent=11 // pred_check
          %p198 = pneg %p128
        $region26: #{tpu_custom_call.1} parent=11 // pred_check_branch
          %200 = sbr.rel (%p198) target = $region28
        $region27: #{tpu_custom_call.1} parent=11 // pred_region
          _
        $region28: #{tpu_custom_call.1} parent=11 // pred_fallthru
          _
      $region12: #{tpu_custom_call.1} parent=5 // pred_fallthru
        _
      %p201 = scmp.lt.s32.totalorder %s18, 2
      // Predicated region
      $region29: #{tpu_custom_call.1} parent=5 // pred_check
        %p202 = pneg %p201
      $region30: #{tpu_custom_call.1} parent=5 // pred_check_branch
        %204 = sbr.rel (%p202) target = $region32
      $region31: #{tpu_custom_call.1} parent=5 // pred_region
        // Predicated region
        $region33: #{tpu_custom_call.1} parent=31 // pred_check
          %p205 = pneg %p38
        $region34: #{tpu_custom_call.1} parent=31 // pred_check_branch
          %207 = sbr.rel (%p205) target = $region36
        $region35: #{tpu_custom_call.1} parent=31 // pred_region
          %s208 = sand.u32 %s28, 1
          %s209 = scalar_lea.sflag [#allocation3], %s208
          %s210 = sand.u32 %s28, 1
          %s211 = smul.addr %s210, 8
          %s212 = scalar_lea.vmem [#allocation2], %s211
          %s214 = ssub.s32 128, 128
          %215 = vsyncadd %s209, %s214
          %s216 = smul.addr %s18, 128
          %s217 = scalar_lea.hbm %s0, %s216
          %s219 = sshll.u32 %s212, 4
          %s220 = int_to_ptr.vmem [resolvable:$true] %s219
          %222 = dma.hbm_to_vmem [thread:$0]  %s217, 128, %s220, %s209
        $region36: #{tpu_custom_call.1} parent=31 // pred_fallthru
          _
      $region32: #{tpu_custom_call.1} parent=5 // pred_fallthru
        _
      %p223 = scmp.le.s32.totalorder 1, %s18
      %p224 = scmp.lt.s32.totalorder %s18, 3
      %p225 = pnand %p223, %p224
      %p226 = pneg %p225
      // Predicated region
      $region37: #{tpu_custom_call.1} parent=5 // pred_check
        _
      $region38: #{tpu_custom_call.1} parent=5 // pred_check_branch
        %228 = sbr.rel (%p225) target = $region40
      $region39: #{tpu_custom_call.1} parent=5 // pred_region
        %s229 = ssub.s32 %s18, 1
        %s230 = sand.u32 %s31, 1
        %s231 = scalar_lea.sflag [#allocation3], %s230
        %s232 = sand.u32 %s31, 1
        %s233 = smul.addr %s232, 8
        %s234 = scalar_lea.vmem [#allocation2], %s233
        // Predicated region
        $region41: #{tpu_custom_call.1} parent=39 // pred_check
          %p235 = pneg %p44
        $region42: #{tpu_custom_call.1} parent=39 // pred_check_branch
          %237 = sbr.rel (%p235) target = $region44
        $region43: #{tpu_custom_call.1} parent=39 // pred_region
          %238 = dma.done %s231, 128
        $region44: #{tpu_custom_call.1} parent=39 // pred_fallthru
          _
        // Predicated region
        $region45: #{tpu_custom_call.1} parent=39 // pred_check
          %p239 = pneg %p65
        $region46: #{tpu_custom_call.1} parent=39 // pred_check_branch
          %241 = sbr.rel (%p239) target = $region48
        $region47: #{tpu_custom_call.1} parent=39 // pred_region
          %242 = dma.done [#allocation6], 512
        $region48: #{tpu_custom_call.1} parent=39 // pred_fallthru
          _
        // Predicated region
        $region49: #{tpu_custom_call.1} parent=39 // pred_check
          %p243 = pneg %p107
        $region50: #{tpu_custom_call.1} parent=39 // pred_check_branch
          %245 = sbr.rel (%p243) target = $region52
        $region51: #{tpu_custom_call.1} parent=39 // pred_region
          %246 = dma.done [#allocation6], 2048
        $region52: #{tpu_custom_call.1} parent=39 // pred_fallthru
          _
        %s247 = sand.u32 %s31, 1
        %s248 = scalar_lea.sflag [#allocation3], %s247
        %s249 = sand.u32 %s31, 1
        %s250 = smul.addr %s249, 8
        %s251 = scalar_lea.vmem [#allocation2], %s250
        %p252 = pneg %p44
        %p253 = pneg %p41
        %p254 = pneg %p65
        %p255 = pneg %p62
        %p256 = pneg %p86
        %p257 = pneg %p83
        %p258 = pneg %p107
        %p259 = pneg %p104
        %p260 = pneg %p128
        %p261 = pneg %p125
        %p262 = pneg %p154
        %p263 = pneg %p151
        %s264 = sand.u32 %s141, 1
        %s265 = scalar_lea.sflag [#allocation4], %s264
        %s266 = sand.u32 %s141, 1
        %s267 = smul.addr %s266, 8
        %s268 = scalar_lea.vmem [#allocation8], %s267
        %v269 = vld [vmem:[%s234] sm:$0xff]
        %v270 = vld [vmem:[#allocation5] sm:$0xff]
        %v271 = vld [vmem:[#allocation5 + $0x8] sm:$0xff]
        %v272 = vld [vmem:[#allocation5 + $0x10] sm:$0xff]
        %v273 = vld [vmem:[#allocation5 + $0x18] sm:$0xff]
        %v274 = vld [vmem:[%s2] sm:$0x1]
        %v276 = vlaneseq
        %v277 = vshrl.u32 %v276, 7
        %v278 = vsub.s32 0, %v277
        %v279 = vrot.slane %v274, %v278
        %vm281 = vcmask 261120
        %v283 = vsel %vm281, %v269, 0
        %285 = vmatprep.subr.mxu0 0.0
        %286 = vmatpush1.msra.mxu0 0.0
        %287 = vmatprep.subr.mxu0 0.0
        %288 = vmatpush1.msra.mxu0 0.0
        %289 = vmatprep.subr.mxu0 0.0
        %290 = vmatpush1.msra.mxu0 0.0
        %291 = vmatprep.subr.mxu0 0.0
        %292 = vmatpush1.msra.mxu0 0.0
        %293 = vmatprep.subr.mxu0 0.0
        %294 = vmatpush1.msra.mxu0 0.0
        %295 = vmatprep.subr.mxu0 0.0
        %296 = vmatpush1.msra.mxu0 0.0
        %297 = vmatprep.subr.mxu0 0.0
        %298 = vmatpush1.msra.mxu0 0.0
        %299 = vmatprep.subr.mxu0 0.0
        %300 = vmatpush1.msra.mxu0 0.0
        %301 = vmatprep.subr.mxu0 0.0
        %302 = vmatpush1.msra.mxu0 0.0
        %303 = vmatprep.subr.mxu0 0.0
        %304 = vmatpush1.msra.mxu0 0.0
        %305 = vmatprep.subr.mxu0 0.0
        %306 = vmatpush1.msra.mxu0 0.0
        %307 = vmatprep.subr.mxu0 0.0
        %308 = vmatpush1.msra.mxu0 0.0
        %309 = vmatprep.subr.mxu0 0.0
        %310 = vmatpush1.msra.mxu0 %v273
        %311 = vmatprep.subr.mxu0 0.0
        %312 = vmatpush1.msra.mxu0 %v272
        %313 = vmatprep.subr.mxu0 0.0
        %314 = vmatpush1.msra.mxu0 %v271
        %315 = vmatprep.subr.mxu0 0.0
        %316 = vmatpush1.msra.mxu0 %v270
        %317 = vmatprep.subr.mxu0 0.0
        %318 = vmatpush2.msra.mxu0 0.0
        %319 = vmatprep.subr.mxu0 0.0
        %320 = vmatpush2.msra.mxu0 0.0
        %321 = vmatprep.subr.mxu0 0.0
        %322 = vmatpush2.msra.mxu0 0.0
        %323 = vmatprep.subr.mxu0 0.0
        %324 = vmatpush2.msra.mxu0 0.0
        %325 = vmatprep.subr.mxu0 0.0
        %326 = vmatpush2.msra.mxu0 0.0
        %327 = vmatprep.subr.mxu0 0.0
        %328 = vmatpush2.msra.mxu0 0.0
        %329 = vmatprep.subr.mxu0 0.0
        %330 = vmatpush2.msra.mxu0 0.0
        %331 = vmatprep.subr.mxu0 0.0
        %332 = vmatpush2.msra.mxu0 0.0
        %333 = vmatprep.subr.mxu0 0.0
        %334 = vmatpush2.msra.mxu0 0.0
        %335 = vmatprep.subr.mxu0 0.0
        %336 = vmatpush2.msra.mxu0 0.0
        %337 = vmatprep.subr.mxu0 0.0
        %338 = vmatpush2.msra.mxu0 0.0
        %339 = vmatprep.subr.mxu0 0.0
        %340 = vmatpush2.msra.mxu0 0.0
        %341 = vmatprep.subr.mxu0 0.0
        %342 = vmatpush2.msra.mxu0 0.0
        %343 = vmatprep.subr.mxu0 0.0
        %344 = vmatpush2.msra.mxu0 0.0
        %345 = vmatprep.subr.mxu0 0.0
        %346 = vmatpush2.msra.mxu0 0.0
        %347 = vmatprep.subr.mxu0 0.0
        %348 = vmatpush2.msra.mxu0 0.0
        %349 = vmatprep.mubr.f32.mxu0 0.0
        %350 = vmatmul.mubr.f32.gmra.mxu0 %v283
        %v351 = vpop.f32.mrf.mxu0
        %v352 = vadd.f32 %v279, %v351
        %v353 = vpop.f32.mrf.mxu0
        %354 = vdwg.mxu0
        %v355 = vxor.u32 %v352, 2147483648
        %v356 = vmul.f32 %v355, 1.442695
        %v357 = vpow.pop %v356
        %v358 = vadd.f32 %v357, 1.0
        %v359 = vrcp.pop %v358
        %v360 = vmul.f32 1.0, %v359
        %v361 = vmul.f32 %v352, %v360
        %v362 = vld [vmem:[#allocation7] sm:$0xff]
        %v363 = vld [vmem:[#allocation7 + $0x8] sm:$0xff]
        %v364 = vld [vmem:[#allocation7 + $0x10] sm:$0xff]
        %v365 = vld [vmem:[#allocation7 + $0x18] sm:$0xff]
        %v366 = vld [vmem:[#allocation7 + $0x20] sm:$0xff]
        %v367 = vld [vmem:[#allocation7 + $0x28] sm:$0xff]
        %v368 = vld [vmem:[#allocation7 + $0x30] sm:$0xff]
        %v369 = vld [vmem:[#allocation7 + $0x38] sm:$0xff]
        %v370 = vld [vmem:[#allocation7 + $0x40] sm:$0xff]
        %v371 = vld [vmem:[#allocation7 + $0x48] sm:$0xff]
        %v372 = vld [vmem:[#allocation7 + $0x50] sm:$0xff]
        %v373 = vld [vmem:[#allocation7 + $0x58] sm:$0xff]
        %v374 = vld [vmem:[#allocation7 + $0x60] sm:$0xff]
        %v375 = vld [vmem:[#allocation7 + $0x68] sm:$0xff]
        %v376 = vld [vmem:[#allocation7 + $0x70] sm:$0xff]
        %v377 = vld [vmem:[#allocation7 + $0x78] sm:$0xff]
        %v378 = vld [vmem:[%s4] sm:$0x1]
        %v380 = vlaneseq
        %v381 = vshrl.u32 %v380, 7
        %v382 = vsub.s32 0, %v381
        %v383 = vrot.slane %v378, %v382
        %385 = vmatprep.subr.mxu0 0.0
        %386 = vmatpush1.msra.mxu0 %v377
        %387 = vmatprep.subr.mxu0 0.0
        %388 = vmatpush1.msra.mxu0 %v376
        %389 = vmatprep.subr.mxu0 0.0
        %390 = vmatpush1.msra.mxu0 %v375
        %391 = vmatprep.subr.mxu0 0.0
        %392 = vmatpush1.msra.mxu0 %v374
        %393 = vmatprep.subr.mxu0 0.0
        %394 = vmatpush1.msra.mxu0 %v373
        %395 = vmatprep.subr.mxu0 0.0
        %396 = vmatpush1.msra.mxu0 %v372
        %397 = vmatprep.subr.mxu0 0.0
        %398 = vmatpush1.msra.mxu0 %v371
        %399 = vmatprep.subr.mxu0 0.0
        %400 = vmatpush1.msra.mxu0 %v370
        %401 = vmatprep.subr.mxu0 0.0
        %402 = vmatpush1.msra.mxu0 %v369
        %403 = vmatprep.subr.mxu0 0.0
        %404 = vmatpush1.msra.mxu0 %v368
        %405 = vmatprep.subr.mxu0 0.0
        %406 = vmatpush1.msra.mxu0 %v367
        %407 = vmatprep.subr.mxu0 0.0
        %408 = vmatpush1.msra.mxu0 %v366
        %409 = vmatprep.subr.mxu0 0.0
        %410 = vmatpush1.msra.mxu0 %v365
        %411 = vmatprep.subr.mxu0 0.0
        %412 = vmatpush1.msra.mxu0 %v364
        %413 = vmatprep.subr.mxu0 0.0
        %414 = vmatpush1.msra.mxu0 %v363
        %415 = vmatprep.subr.mxu0 0.0
        %416 = vmatpush1.msra.mxu0 %v362
        %417 = vmatprep.subr.mxu0 0.0
        %418 = vmatpush2.msra.mxu0 0.0
        %419 = vmatprep.subr.mxu0 0.0
        %420 = vmatpush2.msra.mxu0 0.0
        %421 = vmatprep.subr.mxu0 0.0
        %422 = vmatpush2.msra.mxu0 0.0
        %423 = vmatprep.subr.mxu0 0.0
        %424 = vmatpush2.msra.mxu0 0.0
        %425 = vmatprep.subr.mxu0 0.0
        %426 = vmatpush2.msra.mxu0 0.0
        %427 = vmatprep.subr.mxu0 0.0
        %428 = vmatpush2.msra.mxu0 0.0
        %429 = vmatprep.subr.mxu0 0.0
        %430 = vmatpush2.msra.mxu0 0.0
        %431 = vmatprep.subr.mxu0 0.0
        %432 = vmatpush2.msra.mxu0 0.0
        %433 = vmatprep.subr.mxu0 0.0
        %434 = vmatpush2.msra.mxu0 0.0
        %435 = vmatprep.subr.mxu0 0.0
        %436 = vmatpush2.msra.mxu0 0.0
        %437 = vmatprep.subr.mxu0 0.0
        %438 = vmatpush2.msra.mxu0 0.0
        %439 = vmatprep.subr.mxu0 0.0
        %440 = vmatpush2.msra.mxu0 0.0
        %441 = vmatprep.subr.mxu0 0.0
        %442 = vmatpush2.msra.mxu0 0.0
        %443 = vmatprep.subr.mxu0 0.0
        %444 = vmatpush2.msra.mxu0 0.0
        %445 = vmatprep.subr.mxu0 0.0
        %446 = vmatpush2.msra.mxu0 0.0
        %447 = vmatprep.subr.mxu0 0.0
        %448 = vmatpush2.msra.mxu0 0.0
        %449 = vmatprep.mubr.f32.mxu0 0.0
        %450 = vmatmul.mubr.f32.gmra.mxu0 %v361
        %v451 = vpop.f32.mrf.mxu0
        %v452 = vadd.f32 %v383, %v451
        %v453 = vpop.f32.mrf.mxu0
        %454 = vdwg.mxu0
        %455 = vst [vmem:[%s268] sm:$0xff] %v452
        %s456 = sand.u32 %s141, 1
        %s457 = scalar_lea.sflag [#allocation4], %s456
        %s458 = sand.u32 %s141, 1
        %s459 = smul.addr %s458, 8
        %s460 = scalar_lea.vmem [#allocation8], %s459
        // Predicated region
        $region53: #{tpu_custom_call.1} parent=39 // pred_check
          %p461 = pneg %p151
        $region54: #{tpu_custom_call.1} parent=39 // pred_check_branch
          %463 = sbr.rel (%p461) target = $region56
        $region55: #{tpu_custom_call.1} parent=39 // pred_region
          %s465 = ssub.s32 128, 128
          %466 = vsyncadd %s457, %s465
          %s467 = smul.addr %s23, 128
          %s468 = scalar_lea.hbm %s5, %s467
          %s470 = sshll.u32 %s460, 4
          %s471 = int_to_ptr.vmem [resolvable:$true] %s470
          %473 = dma.vmem_to_hbm [thread:$0]  %s471, 128, %s468, %s457
        $region56: #{tpu_custom_call.1} parent=39 // pred_fallthru
          _
      $region40: #{tpu_custom_call.1} parent=5 // pred_fallthru
        _
      %p474 = scmp.le.s32.totalorder 2, %s18
      // Predicated region
      $region57: #{tpu_custom_call.1} parent=5 // pred_check
        %p475 = pneg %p474
      $region58: #{tpu_custom_call.1} parent=5 // pred_check_branch
        %477 = sbr.rel (%p475) target = $region60
      $region59: #{tpu_custom_call.1} parent=5 // pred_region
        %s478 = ssub.s32 %s18, 2
        // Predicated region
        $region61: #{tpu_custom_call.1} parent=59 // pred_check
          %p479 = pneg %p157
        $region62: #{tpu_custom_call.1} parent=59 // pred_check_branch
          %481 = sbr.rel (%p479) target = $region64
        $region63: #{tpu_custom_call.1} parent=59 // pred_region
          %s482 = sand.u32 %s142, 1
          %s483 = scalar_lea.sflag [#allocation4], %s482
          %s484 = sand.u32 %s142, 1
          %s485 = smul.addr %s484, 8
          %s486 = scalar_lea.vmem [#allocation8], %s485
          %487 = dma.done %s483, 128
        $region64: #{tpu_custom_call.1} parent=59 // pred_fallthru
          _
      $region60: #{tpu_custom_call.1} parent=5 // pred_fallthru
        _
    $region6: #{tpu_custom_call.1} parent=1 // loop_footer
      %s22 = sadd.s32 1, %s18
    $region7: #{tpu_custom_call.1} parent=1 // loop_footer_branch
      %17 = sbr.rel target = $region3
    $region8: #{tpu_custom_call.1} parent=1 // loop_exit
      _
    %488 = vsyncpa [#allocation3], 1
    %s489 = scalar_lea.sflag [#allocation3], 1
    %490 = vsyncpa %s489, 1
    %491 = vsyncpa [#allocation6], 1
    %492 = vsyncpa [#allocation4], 1
    %s493 = scalar_lea.sflag [#allocation4], 1
    %494 = vsyncpa %s493, 1

</llo_original>
